<compile_context>
chip_gen: v5e
topology: v5e:2x2
jax: 0.10.0
libtpu: 0.0.40
codegen_flags: <defaults>
</compile_context>

<pallas_src>
import jax
import jax.numpy as jnp
from jax.experimental import pallas as pl
from jax.experimental.pallas import tpu as pltpu


def _round_up(x, m):
    return ((x + m - 1) // m) * m


def _ranking_partials_kernel(s_ref, t_ref, s0_ref, s1_ref, c0_ref, c5_ref, c1_ref):
    s = s_ref[...]            # (BR, C) f32 scores
    t = t_ref[...]            # (BR, C) f32 targets (padding sentinel == -1.0)
    br, c = s.shape           # static Python ints

    m0 = t == jnp.float32(0.0)
    m5 = t == jnp.float32(0.5)
    m1 = t == jnp.float32(1.0)

    zero = jnp.zeros_like(s)

    def band_sum(x):
        # (BR, C) -> (8, C): split the sublane-major axis into groups of 8
        # (tile-aligned, layout preserving) and add bands -> pure VPU adds,
        # no cross-lane (XLU) work in the streaming path.
        return jnp.sum(x.reshape(br // 8, 8, c), axis=0)

    def fold_lanes(x):
        # (8, C) -> (8, 128): add the C//128 lane tiles together (vreg adds),
        # keeping the per-block output tiny and lane-dense.
        acc = x[:, 0:128]
        for k in range(1, c // 128):
            acc = acc + x[:, k * 128:(k + 1) * 128]
        return acc

    def partial_f32(x):
        return fold_lanes(band_sum(x))

    def partial_i32(m):
        return fold_lanes(band_sum(m.astype(jnp.int32)))

    s0_ref[0] = partial_f32(jnp.where(m0, s, zero))   # sum of scores, class 0
    s1_ref[0] = partial_f32(jnp.where(m1, s, zero))   # sum of scores, class 1
    c0_ref[0] = partial_i32(m0)                       # count, class 0
    c5_ref[0] = partial_i32(m5)                       # count, class 0.5
    c1_ref[0] = partial_i32(m1)                       # count, class 1


def ranking_loss(scores, targets, margin=0.1, *, cols=512, block_rows=1024):
    """Pallas implementation of RankingLoss.forward.

    scores:  (N, 1) or (N,) float32
    targets: (N, 1) or (N,) float32 with values in {0.0, 0.5, 1.0}
    Returns a scalar float32 loss.  (margin is unused in the reference forward.)
    """
    del margin
    scores = jnp.asarray(scores, jnp.float32).reshape(-1)
    targets = jnp.asarray(targets, jnp.float32).reshape(-1)
    n = scores.shape[0]

    assert cols % 128 == 0 and block_rows % 8 == 0
    rows_needed = _round_up(pl.cdiv(n, cols), 8)
    br = _round_up(min(block_rows, rows_needed), 8)
    rows = _round_up(rows_needed, br)
    n_pad = rows * cols
    nb = rows // br
    pad = n_pad - n

    # Padding sentinel target (-1.0) matches no class, so padded elements
    # contribute nothing to any sum/count.
    # TODO(synk): for very large unaligned N the pad is an extra HBM copy; it
    # could be removed by passing `n` via scalar prefetch and masking only the
    # ragged tail block in-kernel.
    s2 = jnp.pad(scores, (0, pad)).reshape(rows, cols)
    t2 = jnp.pad(targets, (0, pad), constant_values=-1.0).reshape(rows, cols)

    out_shapes = (
        jax.ShapeDtypeStruct((nb, 8, 128), jnp.float32),  # partial score sum, class 0
        jax.ShapeDtypeStruct((nb, 8, 128), jnp.float32),  # partial score sum, class 1
        jax.ShapeDtypeStruct((nb, 8, 128), jnp.int32),    # partial count, class 0
        jax.ShapeDtypeStruct((nb, 8, 128), jnp.int32),    # partial count, class 0.5
        jax.ShapeDtypeStruct((nb, 8, 128), jnp.int32),    # partial count, class 1
    )
    part_spec = pl.BlockSpec((1, 8, 128), lambda i: (i, 0, 0))
    in_spec = pl.BlockSpec((br, cols), lambda i: (i, 0))

    p_s0, p_s1, p_c0, p_c5, p_c1 = pl.pallas_call(
        _ranking_partials_kernel,
        out_shape=out_shapes,
        grid_spec=pltpu.PrefetchScalarGridSpec(
            num_scalar_prefetch=0,
            grid=(nb,),
            in_specs=[in_spec, in_spec],
            out_specs=(part_spec,) * 5,
        ),
        compiler_params=pltpu.CompilerParams(
            dimension_semantics=("parallel",),      # no carried state -> megacore OK
            vmem_limit_bytes=40 * 1024 * 1024,      # headroom for 2 MiB blocks; < v7x 64 MiB
        ),
    )(s2, t2)

    # Final combine in plain JAX over KB-scale partials (the only cross-lane
    # reductions in the whole computation).
    sum0 = jnp.sum(p_s0)
    sum1 = jnp.sum(p_s1)
    c0 = jnp.sum(p_c0)
    c5 = jnp.sum(p_c5)
    c1 = jnp.sum(p_c1)

    mean0 = sum0 / c0.astype(jnp.float32)   # 0/0 -> NaN if class 0 empty (matches torch)
    mean1 = sum1 / c1.astype(jnp.float32)   # 0/0 -> NaN if class 1 empty
    loss = 2.0 + mean0 - mean1              # mean(class 0.5) cancels exactly
    # Preserve mean-of-empty NaN semantics when class 0.5 is absent.
    return jnp.where(c5 > 0, loss, jnp.float32(jnp.nan))


def ranking_loss_ref(scores, targets):
    """Pure-JAX reference mirroring the PyTorch forward exactly (for checking)."""
    scores = jnp.asarray(scores, jnp.float32).reshape(-1)
    targets = jnp.asarray(targets, jnp.float32).reshape(-1)
    diff = scores[:, None] - scores[None, :]
    mask_0 = targets == 0.0
    mask_5 = targets == 0.5
    mask_1 = targets == 1.0
    m_a = mask_5[:, None] & mask_0[None, :]
    m_b = mask_1[:, None] & mask_5[None, :]
    mean_a = jnp.sum(jnp.where(m_a, diff, 0.0)) / jnp.sum(m_a)
    mean_b = jnp.sum(jnp.where(m_b, diff, 0.0)) / jnp.sum(m_b)
    return (1.0 - mean_a) + (1.0 - mean_b)


if __name__ == "__main__":
    key = jax.random.PRNGKey(0)
    k1, k2, k3 = jax.random.split(key, 3)

    # --- small batch, single block (exercises padding 8 -> 8x512 slab) ---
    n = 8
    scores = jax.random.normal(k1, (n, 1), dtype=jnp.float32)
    targets = jnp.array(
        [0.0, 0.0, 0.0, 0.5, 0.5, 0.5, 1.0, 1.0], dtype=jnp.float32
    ).reshape(n, 1)
    loss = jax.block_until_ready(ranking_loss(scores, targets))
    ref = jax.block_until_ready(ranking_loss_ref(scores, targets))
    assert jnp.allclose(loss, ref, atol=1e-5, rtol=1e-5), (loss, ref)

    # --- multi-block grid (2 parallel steps), random class labels ---
    n2 = 2048
    scores2 = jax.random.normal(k2, (n2, 1), dtype=jnp.float32)
    targets2 = (jax.random.randint(k3, (n2, 1), 0, 3).astype(jnp.float32) * 0.5)
    loss2 = jax.block_until_ready(
        ranking_loss(scores2, targets2, cols=128, block_rows=8))  # nb == 2
    ref2 = jax.block_until_ready(ranking_loss_ref(scores2, targets2))
    assert jnp.allclose(loss2, ref2, atol=1e-4, rtol=1e-4), (loss2, ref2)

    # --- empty class-0.5 edge case: must be NaN like torch's mean-of-empty ---
    targets3 = jnp.where(jnp.arange(n2)[:, None] % 2 == 0, 0.0, 1.0).astype(jnp.float32)
    loss3 = jax.block_until_ready(ranking_loss(scores2, targets3))
    assert bool(jnp.isnan(loss3)), loss3

    print("KERNEL_OK")
</pallas_src>

<mosaic_0001>
module attributes {stable_mosaic.version = 11 : i64} {
  func.func @_ranking_partials_kernel(%arg0: i32, %arg1: memref<8x512xf32, #tpu.memory_space<vmem>>, %arg2: memref<8x512xf32, #tpu.memory_space<vmem>>, %arg3: memref<1x8x128xf32, #tpu.memory_space<vmem>>, %arg4: memref<1x8x128xf32, #tpu.memory_space<vmem>>, %arg5: memref<1x8x128xi32, #tpu.memory_space<vmem>>, %arg6: memref<1x8x128xi32, #tpu.memory_space<vmem>>, %arg7: memref<1x8x128xi32, #tpu.memory_space<vmem>>) attributes {dimension_semantics = [#tpu.dimension_semantics<parallel>], iteration_bounds = array<i64: 1>, scalar_prefetch = 0 : i64, scratch_operands = 0 : i64, tpu.core_type = #tpu.core_type<tc>, window_params = [{transform_indices = @transform_0, window_bounds = array<i64: 8, 512>}, {transform_indices = @transform_1, window_bounds = array<i64: 8, 512>}, {transform_indices = @transform_2, window_bounds = array<i64: 1, 8, 128>}, {transform_indices = @transform_3, window_bounds = array<i64: 1, 8, 128>}, {transform_indices = @transform_4, window_bounds = array<i64: 1, 8, 128>}, {transform_indices = @transform_5, window_bounds = array<i64: 1, 8, 128>}, {transform_indices = @transform_6, window_bounds = array<i64: 1, 8, 128>}]} {
    %c0 = arith.constant 0 : index
    %c0_0 = arith.constant 0 : index
    %0 = vector.load %arg1[%c0, %c0_0] : memref<8x512xf32, #tpu.memory_space<vmem>>, vector<8x512xf32>
    %c0_1 = arith.constant 0 : index
    %c0_2 = arith.constant 0 : index
    %1 = vector.load %arg2[%c0_1, %c0_2] : memref<8x512xf32, #tpu.memory_space<vmem>>, vector<8x512xf32>
    %cst = arith.constant 0.000000e+00 : f32
    %2 = vector.broadcast %cst : f32 to vector<8x512xf32>
    %3 = arith.cmpf oeq, %1, %2 : vector<8x512xf32>
    %cst_3 = arith.constant 5.000000e-01 : f32
    %4 = vector.broadcast %cst_3 : f32 to vector<8x512xf32>
    %5 = arith.cmpf oeq, %1, %4 : vector<8x512xf32>
    %cst_4 = arith.constant 1.000000e+00 : f32
    %6 = vector.broadcast %cst_4 : f32 to vector<8x512xf32>
    %7 = arith.cmpf oeq, %1, %6 : vector<8x512xf32>
    %cst_5 = arith.constant 0.000000e+00 : f32
    %8 = vector.broadcast %cst_5 : f32 to vector<8x512xf32>
    %9 = arith.select %3, %0, %8 : vector<8x512xi1>, vector<8x512xf32>
    %10 = vector.shape_cast %9 : vector<8x512xf32> to vector<1x8x512xf32>
    %cst_6 = arith.constant dense<0.000000e+00> : vector<8x512xf32>
    %11 = vector.multi_reduction <add>, %10, %cst_6 [0] : vector<1x8x512xf32> to vector<8x512xf32>
    %12 = vector.extract_strided_slice %11 {offsets = [0, 0], sizes = [8, 128], strides = [1, 1]} : vector<8x512xf32> to vector<8x128xf32>
    %13 = vector.extract_strided_slice %11 {offsets = [0, 128], sizes = [8, 128], strides = [1, 1]} : vector<8x512xf32> to vector<8x128xf32>
    %14 = arith.addf %12, %13 : vector<8x128xf32>
    %15 = vector.extract_strided_slice %11 {offsets = [0, 256], sizes = [8, 128], strides = [1, 1]} : vector<8x512xf32> to vector<8x128xf32>
    %16 = arith.addf %14, %15 : vector<8x128xf32>
    %17 = vector.extract_strided_slice %11 {offsets = [0, 384], sizes = [8, 128], strides = [1, 1]} : vector<8x512xf32> to vector<8x128xf32>
    %18 = arith.addf %16, %17 : vector<8x128xf32>
    %c0_7 = arith.constant 0 : index
    %c0_8 = arith.constant 0 : index
    %c0_9 = arith.constant 0 : index
    %19 = vector.load %arg3[%c0_7, %c0_8, %c0_9] : memref<1x8x128xf32, #tpu.memory_space<vmem>>, vector<1x8x128xf32>
    %20 = vector.shape_cast %19 : vector<1x8x128xf32> to vector<8x128xf32>
    %21 = vector.shape_cast %18 : vector<8x128xf32> to vector<1x8x128xf32>
    tpu.vector_store %arg3[%c0_7, %c0_8, %c0_9], %21 {strides = array<i32>} : memref<1x8x128xf32, #tpu.memory_space<vmem>>, vector<1x8x128xf32>,
    %22 = arith.select %7, %0, %8 : vector<8x512xi1>, vector<8x512xf32>
    %23 = vector.shape_cast %22 : vector<8x512xf32> to vector<1x8x512xf32>
    %cst_10 = arith.constant dense<0.000000e+00> : vector<8x512xf32>
    %24 = vector.multi_reduction <add>, %23, %cst_10 [0] : vector<1x8x512xf32> to vector<8x512xf32>
    %25 = vector.extract_strided_slice %24 {offsets = [0, 0], sizes = [8, 128], strides = [1, 1]} : vector<8x512xf32> to vector<8x128xf32>
    %26 = vector.extract_strided_slice %24 {offsets = [0, 128], sizes = [8, 128], strides = [1, 1]} : vector<8x512xf32> to vector<8x128xf32>
    %27 = arith.addf %25, %26 : vector<8x128xf32>
    %28 = vector.extract_strided_slice %24 {offsets = [0, 256], sizes = [8, 128], strides = [1, 1]} : vector<8x512xf32> to vector<8x128xf32>
    %29 = arith.addf %27, %28 : vector<8x128xf32>
    %30 = vector.extract_strided_slice %24 {offsets = [0, 384], sizes = [8, 128], strides = [1, 1]} : vector<8x512xf32> to vector<8x128xf32>
    %31 = arith.addf %29, %30 : vector<8x128xf32>
    %c0_11 = arith.constant 0 : index
    %c0_12 = arith.constant 0 : index
    %c0_13 = arith.constant 0 : index
    %32 = vector.load %arg4[%c0_11, %c0_12, %c0_13] : memref<1x8x128xf32, #tpu.memory_space<vmem>>, vector<1x8x128xf32>
    %33 = vector.shape_cast %32 : vector<1x8x128xf32> to vector<8x128xf32>
    %34 = vector.shape_cast %31 : vector<8x128xf32> to vector<1x8x128xf32>
    tpu.vector_store %arg4[%c0_11, %c0_12, %c0_13], %34 {strides = array<i32>} : memref<1x8x128xf32, #tpu.memory_space<vmem>>, vector<1x8x128xf32>,
    %35 = arith.extui %3 : vector<8x512xi1> to vector<8x512xi32>
    %36 = vector.shape_cast %35 : vector<8x512xi32> to vector<1x8x512xi32>
    %cst_14 = arith.constant dense<0> : vector<8x512xi32>
    %37 = vector.multi_reduction <add>, %36, %cst_14 [0] : vector<1x8x512xi32> to vector<8x512xi32>
    %38 = vector.extract_strided_slice %37 {offsets = [0, 0], sizes = [8, 128], strides = [1, 1]} : vector<8x512xi32> to vector<8x128xi32>
    %39 = vector.extract_strided_slice %37 {offsets = [0, 128], sizes = [8, 128], strides = [1, 1]} : vector<8x512xi32> to vector<8x128xi32>
    %40 = arith.addi %38, %39 : vector<8x128xi32>
    %41 = vector.extract_strided_slice %37 {offsets = [0, 256], sizes = [8, 128], strides = [1, 1]} : vector<8x512xi32> to vector<8x128xi32>
    %42 = arith.addi %40, %41 : vector<8x128xi32>
    %43 = vector.extract_strided_slice %37 {offsets = [0, 384], sizes = [8, 128], strides = [1, 1]} : vector<8x512xi32> to vector<8x128xi32>
    %44 = arith.addi %42, %43 : vector<8x128xi32>
    %c0_15 = arith.constant 0 : index
    %c0_16 = arith.constant 0 : index
    %c0_17 = arith.constant 0 : index
    %45 = vector.load %arg5[%c0_15, %c0_16, %c0_17] : memref<1x8x128xi32, #tpu.memory_space<vmem>>, vector<1x8x128xi32>
    %46 = vector.shape_cast %45 : vector<1x8x128xi32> to vector<8x128xi32>
    %47 = vector.shape_cast %44 : vector<8x128xi32> to vector<1x8x128xi32>
    tpu.vector_store %arg5[%c0_15, %c0_16, %c0_17], %47 {strides = array<i32>} : memref<1x8x128xi32, #tpu.memory_space<vmem>>, vector<1x8x128xi32>,
    %48 = arith.extui %5 : vector<8x512xi1> to vector<8x512xi32>
    %49 = vector.shape_cast %48 : vector<8x512xi32> to vector<1x8x512xi32>
    %cst_18 = arith.constant dense<0> : vector<8x512xi32>
    %50 = vector.multi_reduction <add>, %49, %cst_18 [0] : vector<1x8x512xi32> to vector<8x512xi32>
    %51 = vector.extract_strided_slice %50 {offsets = [0, 0], sizes = [8, 128], strides = [1, 1]} : vector<8x512xi32> to vector<8x128xi32>
    %52 = vector.extract_strided_slice %50 {offsets = [0, 128], sizes = [8, 128], strides = [1, 1]} : vector<8x512xi32> to vector<8x128xi32>
    %53 = arith.addi %51, %52 : vector<8x128xi32>
    %54 = vector.extract_strided_slice %50 {offsets = [0, 256], sizes = [8, 128], strides = [1, 1]} : vector<8x512xi32> to vector<8x128xi32>
    %55 = arith.addi %53, %54 : vector<8x128xi32>
    %56 = vector.extract_strided_slice %50 {offsets = [0, 384], sizes = [8, 128], strides = [1, 1]} : vector<8x512xi32> to vector<8x128xi32>
    %57 = arith.addi %55, %56 : vector<8x128xi32>
    %c0_19 = arith.constant 0 : index
    %c0_20 = arith.constant 0 : index
    %c0_21 = arith.constant 0 : index
    %58 = vector.load %arg6[%c0_19, %c0_20, %c0_21] : memref<1x8x128xi32, #tpu.memory_space<vmem>>, vector<1x8x128xi32>
    %59 = vector.shape_cast %58 : vector<1x8x128xi32> to vector<8x128xi32>
    %60 = vector.shape_cast %57 : vector<8x128xi32> to vector<1x8x128xi32>
    tpu.vector_store %arg6[%c0_19, %c0_20, %c0_21], %60 {strides = array<i32>} : memref<1x8x128xi32, #tpu.memory_space<vmem>>, vector<1x8x128xi32>,
    %61 = arith.extui %7 : vector<8x512xi1> to vector<8x512xi32>
    %62 = vector.shape_cast %61 : vector<8x512xi32> to vector<1x8x512xi32>
    %cst_22 = arith.constant dense<0> : vector<8x512xi32>
    %63 = vector.multi_reduction <add>, %62, %cst_22 [0] : vector<1x8x512xi32> to vector<8x512xi32>
    %64 = vector.extract_strided_slice %63 {offsets = [0, 0], sizes = [8, 128], strides = [1, 1]} : vector<8x512xi32> to vector<8x128xi32>
    %65 = vector.extract_strided_slice %63 {offsets = [0, 128], sizes = [8, 128], strides = [1, 1]} : vector<8x512xi32> to vector<8x128xi32>
    %66 = arith.addi %64, %65 : vector<8x128xi32>
    %67 = vector.extract_strided_slice %63 {offsets = [0, 256], sizes = [8, 128], strides = [1, 1]} : vector<8x512xi32> to vector<8x128xi32>
    %68 = arith.addi %66, %67 : vector<8x128xi32>
    %69 = vector.extract_strided_slice %63 {offsets = [0, 384], sizes = [8, 128], strides = [1, 1]} : vector<8x512xi32> to vector<8x128xi32>
    %70 = arith.addi %68, %69 : vector<8x128xi32>
    %c0_23 = arith.constant 0 : index
    %c0_24 = arith.constant 0 : index
    %c0_25 = arith.constant 0 : index
    %71 = vector.load %arg7[%c0_23, %c0_24, %c0_25] : memref<1x8x128xi32, #tpu.memory_space<vmem>>, vector<1x8x128xi32>
    %72 = vector.shape_cast %71 : vector<1x8x128xi32> to vector<8x128xi32>
    %73 = vector.shape_cast %70 : vector<8x128xi32> to vector<1x8x128xi32>
    tpu.vector_store %arg7[%c0_23, %c0_24, %c0_25], %73 {strides = array<i32>} : memref<1x8x128xi32, #tpu.memory_space<vmem>>, vector<1x8x128xi32>,
    return
  }
  func.func @transform_0(%arg0: i32) -> (i32, i32) {
    %c0_i32 = arith.constant 0 : i32
    %c0_i32_0 = arith.constant 0 : i32
    return %arg0, %c0_i32 : i32, i32
  }
  func.func @transform_1(%arg0: i32) -> (i32, i32) {
    %c0_i32 = arith.constant 0 : i32
    %c0_i32_0 = arith.constant 0 : i32
    return %arg0, %c0_i32 : i32, i32
  }
  func.func @transform_2(%arg0: i32) -> (i32, i32, i32) {
    %c0_i32 = arith.constant 0 : i32
    %c0_i32_0 = arith.constant 0 : i32
    %c0_i32_1 = arith.constant 0 : i32
    return %arg0, %c0_i32, %c0_i32_0 : i32, i32, i32
  }
  func.func @transform_3(%arg0: i32) -> (i32, i32, i32) {
    %c0_i32 = arith.constant 0 : i32
    %c0_i32_0 = arith.constant 0 : i32
    %c0_i32_1 = arith.constant 0 : i32
    return %arg0, %c0_i32, %c0_i32_0 : i32, i32, i32
  }
  func.func @transform_4(%arg0: i32) -> (i32, i32, i32) {
    %c0_i32 = arith.constant 0 : i32
    %c0_i32_0 = arith.constant 0 : i32
    %c0_i32_1 = arith.constant 0 : i32
    return %arg0, %c0_i32, %c0_i32_0 : i32, i32, i32
  }
  func.func @transform_5(%arg0: i32) -> (i32, i32, i32) {
    %c0_i32 = arith.constant 0 : i32
    %c0_i32_0 = arith.constant 0 : i32
    %c0_i32_1 = arith.constant 0 : i32
    return %arg0, %c0_i32, %c0_i32_0 : i32, i32, i32
  }
  func.func @transform_6(%arg0: i32) -> (i32, i32, i32) {
    %c0_i32 = arith.constant 0 : i32
    %c0_i32_0 = arith.constant 0 : i32
    %c0_i32_1 = arith.constant 0 : i32
    return %arg0, %c0_i32, %c0_i32_0 : i32, i32, i32
  }
}

</mosaic_0001>

<llo_original>
// kernel: tpu_custom_call.1
$region0: #{tpu_custom_call.1}
  #allocation0 [shape = 'u32[]', space=smem, size = 0x4, offset = 0x4, fixed_abs, tag = 'smem constant byte address 0x4 - core index']
  #allocation1 [shape = 'u32[72,128]{1,0:T(1,128)}', space=vmem, size = 0x9000, scoped, tag = 'internal scratch']
  %s0 = inlined_call_operand.hbm [shape: f32[8,512], index: 0, kind: input, shape index: {}]
  %s1 = inlined_call_operand.hbm [shape: f32[8,512], index: 1, kind: input, shape index: {}]
  %s2 = inlined_call_operand.hbm [shape: f32[1,8,128], index: 2, kind: output, shape index: {0}]
  %s3 = inlined_call_operand.hbm [shape: f32[1,8,128], index: 3, kind: output, shape index: {1}]
  %s4 = inlined_call_operand.hbm [shape: s32[1,8,128], index: 4, kind: output, shape index: {2}]
  %s5 = inlined_call_operand.hbm [shape: s32[1,8,128], index: 5, kind: output, shape index: {3}]
  %s6 = inlined_call_operand.hbm [shape: s32[1,8,128], index: 6, kind: output, shape index: {4}]
  %7 = xla_tuple %s2, %s3, %s4, %s5, %s6
  %s8 = sld [smem:[#allocation0]]
  $region58: #{tpu_custom_call.1} parent=0
    _
  %s10 = ssub.s32 1, %s8
  %s11 = scalar_select 0, %s10, %s8
  $region1: #{tpu_custom_call.1} parent=0
    #allocation2 [shape = 'u8[16384]{0}', space=vmem, size = 0x4000, scoped, tag = 'input window, operand 0, single buffered']
    #allocation3 [shape = 's32[1]{0}', space=sflag, size = 0x4, scoped, tag = 'scoped memory for tpu_custom_call.1']
    #allocation4 [shape = 's32[1]{0}', space=sflag, size = 0x4, scoped, tag = 'scoped memory for tpu_custom_call.1']
    #allocation5 [shape = 'u8[16384]{0}', space=vmem, size = 0x4000, scoped, tag = 'input window, operand 1, single buffered']
    #allocation6 [shape = 's32[1]{0}', space=sflag, size = 0x4, scoped, tag = 'scoped memory for tpu_custom_call.1']
    #allocation7 [shape = 'u8[4096]{0}', space=vmem, size = 0x1000, scoped, tag = 'output window, operand 0, single buffered']
    #allocation8 [shape = 'u8[4096]{0}', space=vmem, size = 0x1000, scoped, tag = 'output window, operand 1, single buffered']
    #allocation9 [shape = 's32[1]{0}', space=sflag, size = 0x4, scoped, tag = 'scoped memory for tpu_custom_call.1']
    #allocation10 [shape = 'u8[4096]{0}', space=vmem, size = 0x1000, scoped, tag = 'output window, operand 2, single buffered']
    #allocation11 [shape = 'u8[4096]{0}', space=vmem, size = 0x1000, scoped, tag = 'output window, operand 3, single buffered']
    #allocation12 [shape = 's32[1]{0}', space=sflag, size = 0x4, scoped, tag = 'scoped memory for tpu_custom_call.1']
    #allocation13 [shape = 'u8[4096]{0}', space=vmem, size = 0x1000, scoped, tag = 'output window, operand 4, single buffered']
    %12 = vsyncpa [#allocation3], 0
    %13 = vsyncpa [#allocation6], 0
    %14 = vsyncpa [#allocation4], 0
    %15 = vsyncpa [#allocation9], 0
    %16 = vsyncpa [#allocation12], 0
    // Predicated region
    $region2: #{tpu_custom_call.1} parent=1 // pred_check
      _
    $region3: #{tpu_custom_call.1} parent=1 // pred_check_branch
      %18 = sbr.rel (0) target = $region5
    $region4: #{tpu_custom_call.1} parent=1 // pred_region
      %20 = vsyncadd [#allocation3], 0
      %s22 = sshll.u32 %s0, 4
      %s23 = int_to_ptr.hbm [resolvable:$true] %s22
      %s24 = sshll.u32 [#allocation2], 4
      %s25 = int_to_ptr.vmem [resolvable:$true] %s24
      %27 = dma.hbm_to_vmem [thread:$0]  %s23, 512, %s25, [#allocation3]
    $region5: #{tpu_custom_call.1} parent=1 // pred_fallthru
      _
    // Predicated region
    $region6: #{tpu_custom_call.1} parent=1 // pred_check
      _
    $region7: #{tpu_custom_call.1} parent=1 // pred_check_branch
      %29 = sbr.rel (0) target = $region9
    $region8: #{tpu_custom_call.1} parent=1 // pred_region
      %31 = vsyncadd [#allocation6], 0
      %s33 = sshll.u32 %s1, 4
      %s34 = int_to_ptr.hbm [resolvable:$true] %s33
      %s35 = sshll.u32 [#allocation5], 4
      %s36 = int_to_ptr.vmem [resolvable:$true] %s35
      %38 = dma.hbm_to_vmem [thread:$0]  %s34, 512, %s36, [#allocation6]
    $region9: #{tpu_custom_call.1} parent=1 // pred_fallthru
      _
    // Predicated region
    $region10: #{tpu_custom_call.1} parent=1 // pred_check
      _
    $region11: #{tpu_custom_call.1} parent=1 // pred_check_branch
      %40 = sbr.rel (0) target = $region13
    $region12: #{tpu_custom_call.1} parent=1 // pred_region
      %42 = dma.done [#allocation3], 512
    $region13: #{tpu_custom_call.1} parent=1 // pred_fallthru
      _
    // Predicated region
    $region14: #{tpu_custom_call.1} parent=1 // pred_check
      _
    $region15: #{tpu_custom_call.1} parent=1 // pred_check_branch
      %44 = sbr.rel (0) target = $region17
    $region16: #{tpu_custom_call.1} parent=1 // pred_region
      %46 = dma.done [#allocation6], 512
    $region17: #{tpu_custom_call.1} parent=1 // pred_fallthru
      _
    %v47 = vld [vmem:[#allocation2] sm:$0xff]
    %v48 = vld [vmem:[#allocation2 + $0x8] sm:$0xff]
    %v49 = vld [vmem:[#allocation2 + $0x10] sm:$0xff]
    %v50 = vld [vmem:[#allocation2 + $0x18] sm:$0xff]
    %v51 = vld [vmem:[#allocation5] sm:$0xff]
    %v52 = vld [vmem:[#allocation5 + $0x8] sm:$0xff]
    %v53 = vld [vmem:[#allocation5 + $0x10] sm:$0xff]
    %v54 = vld [vmem:[#allocation5 + $0x18] sm:$0xff]
    %vm55 = vcmp.eq.f32.partialorder %v51, 0.0
    %vm56 = vcmp.eq.f32.partialorder %v52, 0.0
    %vm57 = vcmp.eq.f32.partialorder %v53, 0.0
    %vm58 = vcmp.eq.f32.partialorder %v54, 0.0
    %vm59 = vcmp.eq.f32.partialorder %v51, 0.5
    %vm60 = vcmp.eq.f32.partialorder %v52, 0.5
    %vm61 = vcmp.eq.f32.partialorder %v53, 0.5
    %vm62 = vcmp.eq.f32.partialorder %v54, 0.5
    %vm63 = vcmp.eq.f32.partialorder %v51, 1.0
    %vm64 = vcmp.eq.f32.partialorder %v52, 1.0
    %vm65 = vcmp.eq.f32.partialorder %v53, 1.0
    %vm66 = vcmp.eq.f32.partialorder %v54, 1.0
    %v67 = vsel %vm55, %v47, 0.0
    %v68 = vsel %vm56, %v48, 0.0
    %v69 = vsel %vm57, %v49, 0.0
    %v70 = vsel %vm58, %v50, 0.0
    %v71 = vadd.f32 %v67, 0.0
    %v72 = vadd.f32 %v68, 0.0
    %v73 = vadd.f32 %v69, 0.0
    %v74 = vadd.f32 %v70, 0.0
    %v75 = vadd.f32 %v71, %v72
    %v76 = vadd.f32 %v75, %v73
    %v77 = vadd.f32 %v76, %v74
    %78 = vst [vmem:[#allocation7] sm:$0xff] %v77
    %v79 = vsel %vm63, %v47, 0.0
    %v80 = vsel %vm64, %v48, 0.0
    %v81 = vsel %vm65, %v49, 0.0
    %v82 = vsel %vm66, %v50, 0.0
    %v83 = vadd.f32 %v79, 0.0
    %v84 = vadd.f32 %v80, 0.0
    %v85 = vadd.f32 %v81, 0.0
    %v86 = vadd.f32 %v82, 0.0
    %v87 = vadd.f32 %v83, %v84
    %v88 = vadd.f32 %v87, %v85
    %v89 = vadd.f32 %v88, %v86
    %90 = vst [vmem:[#allocation8] sm:$0xff] %v89
    %v91 = vsel %vm55, 1, 0
    %v92 = vsel %vm56, 1, 0
    %v93 = vsel %vm57, 1, 0
    %v94 = vsel %vm58, 1, 0
    %v95 = vadd.s32 %v91, %v92
    %v96 = vadd.s32 %v95, %v93
    %v97 = vadd.s32 %v96, %v94
    %98 = vst [vmem:[#allocation10] sm:$0xff] %v97
    %v99 = vsel %vm59, 1, 0
    %v100 = vsel %vm60, 1, 0
    %v101 = vsel %vm61, 1, 0
    %v102 = vsel %vm62, 1, 0
    %v103 = vadd.s32 %v99, %v100
    %v104 = vadd.s32 %v103, %v101
    %v105 = vadd.s32 %v104, %v102
    %106 = vst [vmem:[#allocation11] sm:$0xff] %v105
    %v107 = vsel %vm63, 1, 0
    %v108 = vsel %vm64, 1, 0
    %v109 = vsel %vm65, 1, 0
    %v110 = vsel %vm66, 1, 0
    %v111 = vadd.s32 %v107, %v108
    %v112 = vadd.s32 %v111, %v109
    %v113 = vadd.s32 %v112, %v110
    %114 = vst [vmem:[#allocation13] sm:$0xff] %v113
    // Predicated region
    $region18: #{tpu_custom_call.1} parent=1 // pred_check
      _
    $region19: #{tpu_custom_call.1} parent=1 // pred_check_branch
      %116 = sbr.rel (0) target = $region21
    $region20: #{tpu_custom_call.1} parent=1 // pred_region
      %118 = vsyncadd [#allocation4], 0
      %s120 = sshll.u32 [#allocation7], 4
      %s121 = int_to_ptr.vmem [resolvable:$true] %s120
      %s122 = sshll.u32 %s2, 4
      %s123 = int_to_ptr.hbm [resolvable:$true] %s122
      %125 = dma.vmem_to_hbm [thread:$0]  %s121, 128, %s123, [#allocation4]
    $region21: #{tpu_custom_call.1} parent=1 // pred_fallthru
      _
    // Predicated region
    $region22: #{tpu_custom_call.1} parent=1 // pred_check
      _
    $region23: #{tpu_custom_call.1} parent=1 // pred_check_branch
      %127 = sbr.rel (0) target = $region25
    $region24: #{tpu_custom_call.1} parent=1 // pred_region
      %129 = vsyncadd [#allocation9], 0
      %s131 = sshll.u32 [#allocation8], 4
      %s132 = int_to_ptr.vmem [resolvable:$true] %s131
      %s133 = sshll.u32 %s3, 4
      %s134 = int_to_ptr.hbm [resolvable:$true] %s133
      %136 = dma.vmem_to_hbm [thread:$0]  %s132, 128, %s134, [#allocation9]
    $region25: #{tpu_custom_call.1} parent=1 // pred_fallthru
      _
    // Predicated region
    $region26: #{tpu_custom_call.1} parent=1 // pred_check
      _
    $region27: #{tpu_custom_call.1} parent=1 // pred_check_branch
      %138 = sbr.rel (0) target = $region29
    $region28: #{tpu_custom_call.1} parent=1 // pred_region
      %140 = vsyncadd [#allocation9], 0
      %s142 = sshll.u32 [#allocation10], 4
      %s143 = int_to_ptr.vmem [resolvable:$true] %s142
      %s144 = sshll.u32 %s4, 4
      %s145 = int_to_ptr.hbm [resolvable:$true] %s144
      %147 = dma.vmem_to_hbm [thread:$0]  %s143, 128, %s145, [#allocation9]
    $region29: #{tpu_custom_call.1} parent=1 // pred_fallthru
      _
    // Predicated region
    $region30: #{tpu_custom_call.1} parent=1 // pred_check
      _
    $region31: #{tpu_custom_call.1} parent=1 // pred_check_branch
      %149 = sbr.rel (0) target = $region33
    $region32: #{tpu_custom_call.1} parent=1 // pred_region
      %151 = vsyncadd [#allocation12], 0
      %s153 = sshll.u32 [#allocation11], 4
      %s154 = int_to_ptr.vmem [resolvable:$true] %s153
      %s155 = sshll.u32 %s5, 4
      %s156 = int_to_ptr.hbm [resolvable:$true] %s155
      %158 = dma.vmem_to_hbm [thread:$0]  %s154, 128, %s156, [#allocation12]
    $region33: #{tpu_custom_call.1} parent=1 // pred_fallthru
      _
    // Predicated region
    $region34: #{tpu_custom_call.1} parent=1 // pred_check
      _
    $region35: #{tpu_custom_call.1} parent=1 // pred_check_branch
      %160 = sbr.rel (0) target = $region37
    $region36: #{tpu_custom_call.1} parent=1 // pred_region
      %162 = vsyncadd [#allocation12], 0
      %s164 = sshll.u32 [#allocation13], 4
      %s165 = int_to_ptr.vmem [resolvable:$true] %s164
      %s166 = sshll.u32 %s6, 4
      %s167 = int_to_ptr.hbm [resolvable:$true] %s166
      %169 = dma.vmem_to_hbm [thread:$0]  %s165, 128, %s167, [#allocation12]
    $region37: #{tpu_custom_call.1} parent=1 // pred_fallthru
      _
    // Predicated region
    $region38: #{tpu_custom_call.1} parent=1 // pred_check
      _
    $region39: #{tpu_custom_call.1} parent=1 // pred_check_branch
      %171 = sbr.rel (0) target = $region41
    $region40: #{tpu_custom_call.1} parent=1 // pred_region
      %173 = dma.done [#allocation4], 128
    $region41: #{tpu_custom_call.1} parent=1 // pred_fallthru
      _
    // Predicated region
    $region42: #{tpu_custom_call.1} parent=1 // pred_check
      _
    $region43: #{tpu_custom_call.1} parent=1 // pred_check_branch
      %175 = sbr.rel (0) target = $region45
    $region44: #{tpu_custom_call.1} parent=1 // pred_region
      %177 = dma.done [#allocation9], 128
    $region45: #{tpu_custom_call.1} parent=1 // pred_fallthru
      _
    // Predicated region
    $region46: #{tpu_custom_call.1} parent=1 // pred_check
      _
    $region47: #{tpu_custom_call.1} parent=1 // pred_check_branch
      %179 = sbr.rel (0) target = $region49
    $region48: #{tpu_custom_call.1} parent=1 // pred_region
      %181 = dma.done [#allocation9], 128
    $region49: #{tpu_custom_call.1} parent=1 // pred_fallthru
      _
    // Predicated region
    $region50: #{tpu_custom_call.1} parent=1 // pred_check
      _
    $region51: #{tpu_custom_call.1} parent=1 // pred_check_branch
      %183 = sbr.rel (0) target = $region53
    $region52: #{tpu_custom_call.1} parent=1 // pred_region
      %185 = dma.done [#allocation12], 128
    $region53: #{tpu_custom_call.1} parent=1 // pred_fallthru
      _
    // Predicated region
    $region54: #{tpu_custom_call.1} parent=1 // pred_check
      _
    $region55: #{tpu_custom_call.1} parent=1 // pred_check_branch
      %187 = sbr.rel (0) target = $region57
    $region56: #{tpu_custom_call.1} parent=1 // pred_region
      %189 = dma.done [#allocation12], 128
    $region57: #{tpu_custom_call.1} parent=1 // pred_fallthru
      _
    %190 = vsyncpa [#allocation3], 1
    %191 = vsyncpa [#allocation6], 1
    %192 = vsyncpa [#allocation4], 1
    %193 = vsyncpa [#allocation9], 1
    %194 = vsyncpa [#allocation12], 1

</llo_original>
